<compile_context>
chip_gen: v5e
topology: v5e:2x2
jax: 0.10.0
libtpu: 0.0.40
codegen_flags: <defaults>
</compile_context>

<pallas_src>
import functools

import jax
import jax.numpy as jnp
from jax.experimental import pallas as pl
from jax.experimental.pallas import tpu as pltpu

# spike_args of the reference code (NACA defaults)
THRESH = 0.5
DECAY = 0.2

_LANE = 128
_SUBLANE = 8


def _ceil_to(x, m):
    return (x + m - 1) // m * m


def _largest_divisor_leq(n, cap):
    for d in range(min(n, cap), 0, -1):
        if n % d == 0:
            return d
    return 1


def _spike_fc_window_kernel(x_ref, w_ref, b_ref,
                            mem_ref, spike_ref, sum_ref,
                            *, decay, thresh, tc, bp):
    t = pl.program_id(1)

    # mem / sumspike carries live in the output VMEM blocks (same block index
    # for every t), zero-initialized at the start of each window / n-tile.
    @pl.when(t == 0)
    def _init():
        mem_ref[...] = jnp.zeros_like(mem_ref)
        sum_ref[...] = jnp.zeros_like(sum_ref)

    # One MXU matmul for the whole time chunk (bf16 inputs, f32 accumulation).
    z = jnp.dot(x_ref[0], w_ref[...], preferred_element_type=jnp.float32)
    z = z + b_ref[...]                                  # (1, TN) broadcast

    mem = mem_ref[...]
    ssum = sum_ref[...]
    # Statically unrolled chunk-local LIF recurrence on the VPU.  The spike
    # carry is folded into mem: mem*decay*(1-spike) == where(mem>th, 0, mem*decay)
    # because spike == (mem_prev > thresh).
    for i in range(tc):
        z_i = z[i * bp:(i + 1) * bp, :]
        mem = jnp.where(mem > thresh, 0.0, mem * decay) + z_i
        ssum = ssum + (mem > thresh).astype(jnp.float32)

    mem_ref[...] = mem
    sum_ref[...] = ssum
    spike_ref[...] = (mem > thresh).astype(jnp.float32)


def spike_fc_window(xs, w_t, b, *, decay=DECAY, thresh=THRESH,
                    max_time_chunk=16, max_n_tile=512,
                    matmul_dtype=jnp.bfloat16):
    """Run a full spike_window of SpikeFC_block in one fused pallas_call.

    xs:  (T, B, F_in)   input for every time step of the window
    w_t: (F_in, F_out)  transposed nn.Linear weight
    b:   (F_out,)       bias
    Returns (mem, spike, sumspike), each (B, F_out) float32: the state after
    the last time step (spike is what forward() returns at t == spike_window).
    """
    T, B, F_in = xs.shape
    F_out = w_t.shape[1]

    Bp = _ceil_to(B, _SUBLANE)
    Np = _ceil_to(F_out, _LANE)
    K = F_in  # contraction dim: full-array block dim, no padding required.

    # Only pad the (large, streamed) xs tensor when strictly necessary; W / b
    # padding is cheap.  Zero padding is exact for this update rule — padded
    # batch rows / output columns still receive the bias and may "spike", but
    # they are sliced off below and never reduced over.
    if Bp != B:
        xs = jnp.pad(xs, ((0, 0), (0, Bp - B), (0, 0)))
    xs = xs.astype(matmul_dtype)

    tc = _largest_divisor_leq(T, max_time_chunk)
    n_chunks = T // tc
    # Layout-free merge of (tc, Bp) -> one big MXU M dim per chunk.
    xs_c = xs.reshape(n_chunks, tc * Bp, K)

    w_p = jnp.pad(w_t, ((0, 0), (0, Np - F_out))).astype(matmul_dtype)
    b_p = jnp.pad(b.astype(jnp.float32).reshape(1, F_out),
                  ((0, 0), (0, Np - F_out)))

    tn = next(s for s in (max_n_tile, 256, 128) if Np % s == 0)
    n_tiles = Np // tn

    kernel = functools.partial(_spike_fc_window_kernel,
                               decay=decay, thresh=thresh, tc=tc, bp=Bp)

    # Explicit VMEM budget: double-buffered inputs + resident output blocks.
    # (Default scoped limits: 16 MiB v5e, 32 MiB v6e/v7x; 64 MiB physical/TC
    # on v7x.)  For very large F_in additionally split K with an inner
    # accumulation loop.
    it = jnp.dtype(matmul_dtype).itemsize
    needed = (2 * tc * Bp * K * it            # x chunks (double-buffered)
              + 2 * K * tn * it               # W tile
              + 2 * _SUBLANE * tn * 4         # bias tile (tile-padded)
              + 3 * 2 * Bp * tn * 4)          # mem/spike/sum blocks
    vmem_limit = int(min(max(2 * needed, 32 * 2 ** 20), 64 * 2 ** 20))

    grid_spec = pltpu.PrefetchScalarGridSpec(
        num_scalar_prefetch=0,
        grid=(n_tiles, n_chunks),
        in_specs=[
            pl.BlockSpec((1, tc * Bp, K), lambda n, t: (t, 0, 0)),  # x chunk
            pl.BlockSpec((K, tn), lambda n, t: (0, n)),   # W tile: resident over t
            pl.BlockSpec((1, tn), lambda n, t: (0, n)),   # bias tile
        ],
        out_specs=(
            pl.BlockSpec((Bp, tn), lambda n, t: (0, n)),  # mem      (VMEM carry)
            pl.BlockSpec((Bp, tn), lambda n, t: (0, n)),  # spike
            pl.BlockSpec((Bp, tn), lambda n, t: (0, n)),  # sumspike (VMEM carry)
        ),
    )

    mem_p, spike_p, sum_p = pl.pallas_call(
        kernel,
        out_shape=(
            jax.ShapeDtypeStruct((Bp, Np), jnp.float32),
            jax.ShapeDtypeStruct((Bp, Np), jnp.float32),
            jax.ShapeDtypeStruct((Bp, Np), jnp.float32),
        ),
        grid_spec=grid_spec,
        compiler_params=pltpu.CompilerParams(
            # n-tiles of F_out are embarrassingly parallel (megacore on v7x);
            # time is a true recurrence -> "arbitrary".
            dimension_semantics=("parallel", "arbitrary"),
            vmem_limit_bytes=vmem_limit),
    )(xs_c, w_p, b_p)

    return mem_p[:B, :F_out], spike_p[:B, :F_out], sum_p[:B, :F_out]


class SpikeFCBlock:
    """SpikeFC_block (dropout=0) with the spike_window fused into one kernel."""

    def __init__(self, in_features, out_features, batch_size, spike_window, key):
        self.in_features = in_features
        self.out_features = out_features
        self.batch_size = batch_size
        self.spike_window = spike_window
        # Deterministic init matching nn.Linear default: U(-1/sqrt(in), 1/sqrt(in))
        kw, kb = jax.random.split(key)
        bound = 1.0 / float(in_features) ** 0.5
        w = jax.random.uniform(kw, (out_features, in_features), jnp.float32,
                               -bound, bound)
        self.w_t = w.T                       # (in_features, out_features)
        self.b = jax.random.uniform(kb, (out_features,), jnp.float32,
                                    -bound, bound)
        self.mem = None
        self.spike = None
        self.sumspike = None
        self.old_spike = None

    def forward_window(self, xs, labels=None):
        """Process one full spike_window xs=(T, B, F_in) in a single fused
        kernel; returns the spike of the last time step (what the original
        per-step forward() returns when time_counter == spike_window).
        State is re-initialized to zero per window, matching the original
        time_counter==0 reset."""
        assert xs.shape == (self.spike_window, self.batch_size, self.in_features)
        self.mem, self.spike, self.sumspike = spike_fc_window(
            xs, self.w_t, self.b)
        self.old_spike = self.spike
        # TODO(synk): end-of-window NI / expectation / local_modulation
        # gradient injection is a backward-only side effect; forward output is
        # unaffected, so it is intentionally omitted.
        return self.spike


if __name__ == "__main__":
    key = jax.random.PRNGKey(0)
    k_init, k_x = jax.random.split(key)

    batch_size = 8
    in_features = 64
    out_features = 32
    spike_window = 8

    block = SpikeFCBlock(in_features, out_features, batch_size, spike_window,
                         k_init)

    xs = jax.random.normal(
        k_x, (spike_window, batch_size, in_features), jnp.float32)

    spike_out = block.forward_window(xs, labels=None)
    spike_out = jax.block_until_ready(spike_out)
    mem_out = jax.block_until_ready(block.mem)
    sum_out = jax.block_until_ready(block.sumspike)

    # Pure-JAX step-by-step reference of the same spike_window rollout, with
    # matching matmul precision (bf16 operands, f32 accumulation).
    xb = xs.astype(jnp.bfloat16)
    wb = block.w_t.astype(jnp.bfloat16)
    ref_mem = jnp.zeros((batch_size, out_features), jnp.float32)
    ref_spk = jnp.zeros((batch_size, out_features), jnp.float32)
    ref_sum = jnp.zeros((batch_size, out_features), jnp.float32)
    for t in range(spike_window):
        z = jnp.dot(xb[t], wb, preferred_element_type=jnp.float32) + block.b
        ref_mem = ref_mem * DECAY * (1.0 - ref_spk) + z
        ref_spk = (ref_mem > THRESH).astype(jnp.float32)
        ref_sum = ref_sum + ref_spk

    assert jnp.allclose(mem_out, ref_mem, atol=1e-4, rtol=1e-4), \
        "mem mismatch vs reference"
    # Note: a membrane value sitting exactly at the threshold could flip the
    # spike between MXU and XLA accumulation orders; probability is negligible
    # for random inputs.
    assert jnp.array_equal(spike_out, ref_spk), "spike mismatch vs reference"
    assert jnp.array_equal(sum_out, ref_sum), "sumspike mismatch vs reference"

    print("KERNEL_OK")
</pallas_src>

<mosaic_0001>
module attributes {stable_mosaic.version = 11 : i64} {
  func.func @_spike_fc_window_kernel(%arg0: i32, %arg1: i32, %arg2: memref<1x64x64xbf16, #tpu.memory_space<vmem>>, %arg3: memref<64x128xbf16, #tpu.memory_space<vmem>>, %arg4: memref<1x128xf32, #tpu.memory_space<vmem>>, %arg5: memref<8x128xf32, #tpu.memory_space<vmem>>, %arg6: memref<8x128xf32, #tpu.memory_space<vmem>>, %arg7: memref<8x128xf32, #tpu.memory_space<vmem>>) attributes {dimension_semantics = [#tpu.dimension_semantics<parallel>, #tpu.dimension_semantics<arbitrary>], iteration_bounds = array<i64: 1, 1>, scalar_prefetch = 0 : i64, scratch_operands = 0 : i64, tpu.core_type = #tpu.core_type<tc>, window_params = [{transform_indices = @transform_0, window_bounds = array<i64: 1, 64, 64>}, {transform_indices = @transform_1, window_bounds = array<i64: 64, 128>}, {transform_indices = @transform_2, window_bounds = array<i64: 1, 128>}, {transform_indices = @transform_3, window_bounds = array<i64: 8, 128>}, {transform_indices = @transform_4, window_bounds = array<i64: 8, 128>}, {transform_indices = @transform_5, window_bounds = array<i64: 8, 128>}]} {
    %c0_i32 = arith.constant 0 : i32
    %0 = arith.cmpi eq, %arg1, %c0_i32 : i32
    %1 = arith.extui %0 : i1 to i32
    %c0_i32_0 = arith.constant 0 : i32
    %2 = arith.cmpi ne, %1, %c0_i32_0 : i32
    scf.if %2 {
      %cst_50 = arith.constant 0.000000e+00 : f32
      %123 = vector.broadcast %cst_50 : f32 to vector<8x128xf32>
      %c0_51 = arith.constant 0 : index
      %c0_52 = arith.constant 0 : index
      %124 = vector.load %arg5[%c0_51, %c0_52] : memref<8x128xf32, #tpu.memory_space<vmem>>, vector<8x128xf32>
      tpu.vector_store %arg5[%c0_51, %c0_52], %123 {strides = array<i32>} : memref<8x128xf32, #tpu.memory_space<vmem>>, vector<8x128xf32>,
      %cst_53 = arith.constant 0.000000e+00 : f32
      %125 = vector.broadcast %cst_53 : f32 to vector<8x128xf32>
      %c0_54 = arith.constant 0 : index
      %c0_55 = arith.constant 0 : index
      %126 = vector.load %arg7[%c0_54, %c0_55] : memref<8x128xf32, #tpu.memory_space<vmem>>, vector<8x128xf32>
      tpu.vector_store %arg7[%c0_54, %c0_55], %125 {strides = array<i32>} : memref<8x128xf32, #tpu.memory_space<vmem>>, vector<8x128xf32>,
    } else {
    }
    %c0 = arith.constant 0 : index
    %c0_1 = arith.constant 0 : index
    %c0_2 = arith.constant 0 : index
    %3 = vector.load %arg2[%c0, %c0_1, %c0_2] : memref<1x64x64xbf16, #tpu.memory_space<vmem>>, vector<1x64x64xbf16>
    %4 = vector.shape_cast %3 : vector<1x64x64xbf16> to vector<64x64xbf16>
    %c0_3 = arith.constant 0 : index
    %c0_4 = arith.constant 0 : index
    %5 = vector.load %arg3[%c0_3, %c0_4] : memref<64x128xbf16, #tpu.memory_space<vmem>>, vector<64x128xbf16>
    %cst = arith.constant dense<0.000000e+00> : vector<64x128xf32>
    %6 = tpu.matmul %4, %5, %cst {dimension_numbers = #tpu.dot_dimension_numbers<[1], [0], [0], [1], [0, 0, 1, 1], [], []>} : vector<64x64xbf16>, vector<64x128xbf16>, vector<64x128xf32> -> vector<64x128xf32>
    %c0_5 = arith.constant 0 : index
    %c0_6 = arith.constant 0 : index
    %7 = vector.load %arg4[%c0_5, %c0_6] : memref<1x128xf32, #tpu.memory_space<vmem>>, vector<1x128xf32>
    %8 = vector.broadcast %7 : vector<1x128xf32> to vector<64x128xf32>
    %9 = arith.addf %6, %8 : vector<64x128xf32>
    %c0_7 = arith.constant 0 : index
    %c0_8 = arith.constant 0 : index
    %10 = vector.load %arg5[%c0_7, %c0_8] : memref<8x128xf32, #tpu.memory_space<vmem>>, vector<8x128xf32>
    %c0_9 = arith.constant 0 : index
    %c0_10 = arith.constant 0 : index
    %11 = vector.load %arg7[%c0_9, %c0_10] : memref<8x128xf32, #tpu.memory_space<vmem>>, vector<8x128xf32>
    %12 = vector.extract_strided_slice %9 {offsets = [0, 0], sizes = [8, 128], strides = [1, 1]} : vector<64x128xf32> to vector<8x128xf32>
    %cst_11 = arith.constant 5.000000e-01 : f32
    %13 = vector.broadcast %cst_11 : f32 to vector<8x128xf32>
    %14 = arith.cmpf ogt, %10, %13 : vector<8x128xf32>
    %cst_12 = arith.constant 2.000000e-01 : f32
    %15 = vector.broadcast %cst_12 : f32 to vector<8x128xf32>
    %16 = arith.mulf %10, %15 : vector<8x128xf32>
    %cst_13 = arith.constant 0.000000e+00 : f32
    %17 = vector.broadcast %cst_13 : f32 to vector<8x128xf32>
    %18 = arith.select %14, %17, %16 : vector<8x128xi1>, vector<8x128xf32>
    %19 = arith.addf %18, %12 : vector<8x128xf32>
    %cst_14 = arith.constant 5.000000e-01 : f32
    %20 = vector.broadcast %cst_14 : f32 to vector<8x128xf32>
    %21 = arith.cmpf ogt, %19, %20 : vector<8x128xf32>
    %22 = arith.extui %21 : vector<8x128xi1> to vector<8x128xi32>
    %23 = arith.sitofp %22 : vector<8x128xi32> to vector<8x128xf32>
    %24 = arith.addf %11, %23 : vector<8x128xf32>
    %25 = vector.extract_strided_slice %9 {offsets = [8, 0], sizes = [8, 128], strides = [1, 1]} : vector<64x128xf32> to vector<8x128xf32>
    %cst_15 = arith.constant 5.000000e-01 : f32
    %26 = vector.broadcast %cst_15 : f32 to vector<8x128xf32>
    %27 = arith.cmpf ogt, %19, %26 : vector<8x128xf32>
    %cst_16 = arith.constant 2.000000e-01 : f32
    %28 = vector.broadcast %cst_16 : f32 to vector<8x128xf32>
    %29 = arith.mulf %19, %28 : vector<8x128xf32>
    %cst_17 = arith.constant 0.000000e+00 : f32
    %30 = vector.broadcast %cst_17 : f32 to vector<8x128xf32>
    %31 = arith.select %27, %30, %29 : vector<8x128xi1>, vector<8x128xf32>
    %32 = arith.addf %31, %25 : vector<8x128xf32>
    %cst_18 = arith.constant 5.000000e-01 : f32
    %33 = vector.broadcast %cst_18 : f32 to vector<8x128xf32>
    %34 = arith.cmpf ogt, %32, %33 : vector<8x128xf32>
    %35 = arith.extui %34 : vector<8x128xi1> to vector<8x128xi32>
    %36 = arith.sitofp %35 : vector<8x128xi32> to vector<8x128xf32>
    %37 = arith.addf %24, %36 : vector<8x128xf32>
    %38 = vector.extract_strided_slice %9 {offsets = [16, 0], sizes = [8, 128], strides = [1, 1]} : vector<64x128xf32> to vector<8x128xf32>
    %cst_19 = arith.constant 5.000000e-01 : f32
    %39 = vector.broadcast %cst_19 : f32 to vector<8x128xf32>
    %40 = arith.cmpf ogt, %32, %39 : vector<8x128xf32>
    %cst_20 = arith.constant 2.000000e-01 : f32
    %41 = vector.broadcast %cst_20 : f32 to vector<8x128xf32>
    %42 = arith.mulf %32, %41 : vector<8x128xf32>
    %cst_21 = arith.constant 0.000000e+00 : f32
    %43 = vector.broadcast %cst_21 : f32 to vector<8x128xf32>
    %44 = arith.select %40, %43, %42 : vector<8x128xi1>, vector<8x128xf32>
    %45 = arith.addf %44, %38 : vector<8x128xf32>
    %cst_22 = arith.constant 5.000000e-01 : f32
    %46 = vector.broadcast %cst_22 : f32 to vector<8x128xf32>
    %47 = arith.cmpf ogt, %45, %46 : vector<8x128xf32>
    %48 = arith.extui %47 : vector<8x128xi1> to vector<8x128xi32>
    %49 = arith.sitofp %48 : vector<8x128xi32> to vector<8x128xf32>
    %50 = arith.addf %37, %49 : vector<8x128xf32>
    %51 = vector.extract_strided_slice %9 {offsets = [24, 0], sizes = [8, 128], strides = [1, 1]} : vector<64x128xf32> to vector<8x128xf32>
    %cst_23 = arith.constant 5.000000e-01 : f32
    %52 = vector.broadcast %cst_23 : f32 to vector<8x128xf32>
    %53 = arith.cmpf ogt, %45, %52 : vector<8x128xf32>
    %cst_24 = arith.constant 2.000000e-01 : f32
    %54 = vector.broadcast %cst_24 : f32 to vector<8x128xf32>
    %55 = arith.mulf %45, %54 : vector<8x128xf32>
    %cst_25 = arith.constant 0.000000e+00 : f32
    %56 = vector.broadcast %cst_25 : f32 to vector<8x128xf32>
    %57 = arith.select %53, %56, %55 : vector<8x128xi1>, vector<8x128xf32>
    %58 = arith.addf %57, %51 : vector<8x128xf32>
    %cst_26 = arith.constant 5.000000e-01 : f32
    %59 = vector.broadcast %cst_26 : f32 to vector<8x128xf32>
    %60 = arith.cmpf ogt, %58, %59 : vector<8x128xf32>
    %61 = arith.extui %60 : vector<8x128xi1> to vector<8x128xi32>
    %62 = arith.sitofp %61 : vector<8x128xi32> to vector<8x128xf32>
    %63 = arith.addf %50, %62 : vector<8x128xf32>
    %64 = vector.extract_strided_slice %9 {offsets = [32, 0], sizes = [8, 128], strides = [1, 1]} : vector<64x128xf32> to vector<8x128xf32>
    %cst_27 = arith.constant 5.000000e-01 : f32
    %65 = vector.broadcast %cst_27 : f32 to vector<8x128xf32>
    %66 = arith.cmpf ogt, %58, %65 : vector<8x128xf32>
    %cst_28 = arith.constant 2.000000e-01 : f32
    %67 = vector.broadcast %cst_28 : f32 to vector<8x128xf32>
    %68 = arith.mulf %58, %67 : vector<8x128xf32>
    %cst_29 = arith.constant 0.000000e+00 : f32
    %69 = vector.broadcast %cst_29 : f32 to vector<8x128xf32>
    %70 = arith.select %66, %69, %68 : vector<8x128xi1>, vector<8x128xf32>
    %71 = arith.addf %70, %64 : vector<8x128xf32>
    %cst_30 = arith.constant 5.000000e-01 : f32
    %72 = vector.broadcast %cst_30 : f32 to vector<8x128xf32>
    %73 = arith.cmpf ogt, %71, %72 : vector<8x128xf32>
    %74 = arith.extui %73 : vector<8x128xi1> to vector<8x128xi32>
    %75 = arith.sitofp %74 : vector<8x128xi32> to vector<8x128xf32>
    %76 = arith.addf %63, %75 : vector<8x128xf32>
    %77 = vector.extract_strided_slice %9 {offsets = [40, 0], sizes = [8, 128], strides = [1, 1]} : vector<64x128xf32> to vector<8x128xf32>
    %cst_31 = arith.constant 5.000000e-01 : f32
    %78 = vector.broadcast %cst_31 : f32 to vector<8x128xf32>
    %79 = arith.cmpf ogt, %71, %78 : vector<8x128xf32>
    %cst_32 = arith.constant 2.000000e-01 : f32
    %80 = vector.broadcast %cst_32 : f32 to vector<8x128xf32>
    %81 = arith.mulf %71, %80 : vector<8x128xf32>
    %cst_33 = arith.constant 0.000000e+00 : f32
    %82 = vector.broadcast %cst_33 : f32 to vector<8x128xf32>
    %83 = arith.select %79, %82, %81 : vector<8x128xi1>, vector<8x128xf32>
    %84 = arith.addf %83, %77 : vector<8x128xf32>
    %cst_34 = arith.constant 5.000000e-01 : f32
    %85 = vector.broadcast %cst_34 : f32 to vector<8x128xf32>
    %86 = arith.cmpf ogt, %84, %85 : vector<8x128xf32>
    %87 = arith.extui %86 : vector<8x128xi1> to vector<8x128xi32>
    %88 = arith.sitofp %87 : vector<8x128xi32> to vector<8x128xf32>
    %89 = arith.addf %76, %88 : vector<8x128xf32>
    %90 = vector.extract_strided_slice %9 {offsets = [48, 0], sizes = [8, 128], strides = [1, 1]} : vector<64x128xf32> to vector<8x128xf32>
    %cst_35 = arith.constant 5.000000e-01 : f32
    %91 = vector.broadcast %cst_35 : f32 to vector<8x128xf32>
    %92 = arith.cmpf ogt, %84, %91 : vector<8x128xf32>
    %cst_36 = arith.constant 2.000000e-01 : f32
    %93 = vector.broadcast %cst_36 : f32 to vector<8x128xf32>
    %94 = arith.mulf %84, %93 : vector<8x128xf32>
    %cst_37 = arith.constant 0.000000e+00 : f32
    %95 = vector.broadcast %cst_37 : f32 to vector<8x128xf32>
    %96 = arith.select %92, %95, %94 : vector<8x128xi1>, vector<8x128xf32>
    %97 = arith.addf %96, %90 : vector<8x128xf32>
    %cst_38 = arith.constant 5.000000e-01 : f32
    %98 = vector.broadcast %cst_38 : f32 to vector<8x128xf32>
    %99 = arith.cmpf ogt, %97, %98 : vector<8x128xf32>
    %100 = arith.extui %99 : vector<8x128xi1> to vector<8x128xi32>
    %101 = arith.sitofp %100 : vector<8x128xi32> to vector<8x128xf32>
    %102 = arith.addf %89, %101 : vector<8x128xf32>
    %103 = vector.extract_strided_slice %9 {offsets = [56, 0], sizes = [8, 128], strides = [1, 1]} : vector<64x128xf32> to vector<8x128xf32>
    %cst_39 = arith.constant 5.000000e-01 : f32
    %104 = vector.broadcast %cst_39 : f32 to vector<8x128xf32>
    %105 = arith.cmpf ogt, %97, %104 : vector<8x128xf32>
    %cst_40 = arith.constant 2.000000e-01 : f32
    %106 = vector.broadcast %cst_40 : f32 to vector<8x128xf32>
    %107 = arith.mulf %97, %106 : vector<8x128xf32>
    %cst_41 = arith.constant 0.000000e+00 : f32
    %108 = vector.broadcast %cst_41 : f32 to vector<8x128xf32>
    %109 = arith.select %105, %108, %107 : vector<8x128xi1>, vector<8x128xf32>
    %110 = arith.addf %109, %103 : vector<8x128xf32>
    %cst_42 = arith.constant 5.000000e-01 : f32
    %111 = vector.broadcast %cst_42 : f32 to vector<8x128xf32>
    %112 = arith.cmpf ogt, %110, %111 : vector<8x128xf32>
    %113 = arith.extui %112 : vector<8x128xi1> to vector<8x128xi32>
    %114 = arith.sitofp %113 : vector<8x128xi32> to vector<8x128xf32>
    %115 = arith.addf %102, %114 : vector<8x128xf32>
    %c0_43 = arith.constant 0 : index
    %c0_44 = arith.constant 0 : index
    %116 = vector.load %arg5[%c0_43, %c0_44] : memref<8x128xf32, #tpu.memory_space<vmem>>, vector<8x128xf32>
    tpu.vector_store %arg5[%c0_43, %c0_44], %110 {strides = array<i32>} : memref<8x128xf32, #tpu.memory_space<vmem>>, vector<8x128xf32>,
    %c0_45 = arith.constant 0 : index
    %c0_46 = arith.constant 0 : index
    %117 = vector.load %arg7[%c0_45, %c0_46] : memref<8x128xf32, #tpu.memory_space<vmem>>, vector<8x128xf32>
    tpu.vector_store %arg7[%c0_45, %c0_46], %115 {strides = array<i32>} : memref<8x128xf32, #tpu.memory_space<vmem>>, vector<8x128xf32>,
    %cst_47 = arith.constant 5.000000e-01 : f32
    %118 = vector.broadcast %cst_47 : f32 to vector<8x128xf32>
    %119 = arith.cmpf ogt, %110, %118 : vector<8x128xf32>
    %120 = arith.extui %119 : vector<8x128xi1> to vector<8x128xi32>
    %121 = arith.sitofp %120 : vector<8x128xi32> to vector<8x128xf32>
    %c0_48 = arith.constant 0 : index
    %c0_49 = arith.constant 0 : index
    %122 = vector.load %arg6[%c0_48, %c0_49] : memref<8x128xf32, #tpu.memory_space<vmem>>, vector<8x128xf32>
    tpu.vector_store %arg6[%c0_48, %c0_49], %121 {strides = array<i32>} : memref<8x128xf32, #tpu.memory_space<vmem>>, vector<8x128xf32>,
    return
  }
  func.func @transform_0(%arg0: i32, %arg1: i32) -> (i32, i32, i32) {
    %c0_i32 = arith.constant 0 : i32
    %c0_i32_0 = arith.constant 0 : i32
    %c0_i32_1 = arith.constant 0 : i32
    return %arg1, %c0_i32, %c0_i32_0 : i32, i32, i32
  }
  func.func @transform_1(%arg0: i32, %arg1: i32) -> (i32, i32) {
    %c0_i32 = arith.constant 0 : i32
    %c0_i32_0 = arith.constant 0 : i32
    return %c0_i32, %arg0 : i32, i32
  }
  func.func @transform_2(%arg0: i32, %arg1: i32) -> (i32, i32) {
    %c0_i32 = arith.constant 0 : i32
    %c0_i32_0 = arith.constant 0 : i32
    return %c0_i32, %arg0 : i32, i32
  }
  func.func @transform_3(%arg0: i32, %arg1: i32) -> (i32, i32) {
    %c0_i32 = arith.constant 0 : i32
    %c0_i32_0 = arith.constant 0 : i32
    return %c0_i32, %arg0 : i32, i32
  }
  func.func @transform_4(%arg0: i32, %arg1: i32) -> (i32, i32) {
    %c0_i32 = arith.constant 0 : i32
    %c0_i32_0 = arith.constant 0 : i32
    return %c0_i32, %arg0 : i32, i32
  }
  func.func @transform_5(%arg0: i32, %arg1: i32) -> (i32, i32) {
    %c0_i32 = arith.constant 0 : i32
    %c0_i32_0 = arith.constant 0 : i32
    return %c0_i32, %arg0 : i32, i32
  }
}

</mosaic_0001>

<llo_original>
// kernel: tpu_custom_call.1
$region0: #{tpu_custom_call.1}
  #allocation0 [shape = 'u32[]', space=smem, size = 0x4, offset = 0x4, fixed_abs, tag = 'smem constant byte address 0x4 - core index']
  #allocation1 [shape = 'u32[72,128]{1,0:T(1,128)}', space=vmem, size = 0x9000, scoped, tag = 'internal scratch']
  %s0 = inlined_call_operand.hbm [shape: bf16[1,64,64], index: 0, kind: input, shape index: {}]
  %s1 = inlined_call_operand.hbm [shape: bf16[64,128], index: 1, kind: input, shape index: {}]
  %s2 = inlined_call_operand.vmem [shape: f32[1,128], index: 2, kind: input, shape index: {}]
  %s3 = inlined_call_operand.hbm [shape: f32[8,128], index: 3, kind: output, shape index: {0}]
  %s4 = inlined_call_operand.hbm [shape: f32[8,128], index: 4, kind: output, shape index: {1}]
  %s5 = inlined_call_operand.hbm [shape: f32[8,128], index: 5, kind: output, shape index: {2}]
  %6 = xla_tuple %s3, %s4, %s5
  %s7 = sld [smem:[#allocation0]]
  $region50: #{tpu_custom_call.1} parent=0
    _
  %s9 = ssub.s32 1, %s7
  %s10 = scalar_select 0, %s9, %s7
  $region1: #{tpu_custom_call.1} parent=0
    #allocation2 [shape = 'u8[16384]{0}', space=vmem, size = 0x4000, scoped, tag = 'input window, operand 0, single buffered']
    #allocation3 [shape = 's32[1]{0}', space=sflag, size = 0x4, scoped, tag = 'scoped memory for tpu_custom_call.1']
    #allocation4 [shape = 's32[1]{0}', space=sflag, size = 0x4, scoped, tag = 'scoped memory for tpu_custom_call.1']
    #allocation5 [shape = 'u8[16384]{0}', space=vmem, size = 0x4000, scoped, tag = 'input window, operand 1, single buffered']
    #allocation6 [shape = 's32[1]{0}', space=sflag, size = 0x4, scoped, tag = 'scoped memory for tpu_custom_call.1']
    #allocation7 [shape = 'u8[4096]{0}', space=vmem, size = 0x1000, scoped, tag = 'output window, operand 0, single buffered']
    #allocation8 [shape = 'u8[4096]{0}', space=vmem, size = 0x1000, scoped, tag = 'output window, operand 1, single buffered']
    #allocation9 [shape = 's32[1]{0}', space=sflag, size = 0x4, scoped, tag = 'scoped memory for tpu_custom_call.1']
    #allocation10 [shape = 'u8[4096]{0}', space=vmem, size = 0x1000, scoped, tag = 'output window, operand 2, single buffered']
    %11 = vsyncpa [#allocation3], 0
    %12 = vsyncpa [#allocation6], 0
    %13 = vsyncpa [#allocation4], 0
    %14 = vsyncpa [#allocation9], 0
    // Predicated region
    $region2: #{tpu_custom_call.1} parent=1 // pred_check
      _
    $region3: #{tpu_custom_call.1} parent=1 // pred_check_branch
      %16 = sbr.rel (0) target = $region5
    $region4: #{tpu_custom_call.1} parent=1 // pred_region
      %18 = vsyncadd [#allocation3], 0
      %s19 = sshll.u32 %s0, 4
      %s20 = int_to_ptr.hbm [resolvable:$true] %s19
      %s21 = sshll.u32 [#allocation2], 4
      %s22 = int_to_ptr.vmem [resolvable:$true] %s21
      %27 = dma.hbm_to_vmem [thread:$0]  %s20, 512, %s22, [#allocation3], 64, 64, 4
    $region5: #{tpu_custom_call.1} parent=1 // pred_fallthru
      _
    // Predicated region
    $region6: #{tpu_custom_call.1} parent=1 // pred_check
      _
    $region7: #{tpu_custom_call.1} parent=1 // pred_check_branch
      %29 = sbr.rel (0) target = $region9
    $region8: #{tpu_custom_call.1} parent=1 // pred_region
      %31 = vsyncadd [#allocation6], 0
      %s32 = sshll.u32 %s1, 4
      %s33 = int_to_ptr.hbm [resolvable:$true] %s32
      %s34 = sshll.u32 [#allocation5], 4
      %s35 = int_to_ptr.vmem [resolvable:$true] %s34
      %40 = dma.hbm_to_vmem [thread:$0]  %s33, 512, %s35, [#allocation6], 64, 64, 4
    $region9: #{tpu_custom_call.1} parent=1 // pred_fallthru
      _
    // Predicated region
    $region10: #{tpu_custom_call.1} parent=1 // pred_check
      _
    $region11: #{tpu_custom_call.1} parent=1 // pred_check_branch
      %42 = sbr.rel (0) target = $region13
    $region12: #{tpu_custom_call.1} parent=1 // pred_region
      _
    $region13: #{tpu_custom_call.1} parent=1 // pred_fallthru
      _
    // Predicated region
    $region14: #{tpu_custom_call.1} parent=1 // pred_check
      _
    $region15: #{tpu_custom_call.1} parent=1 // pred_check_branch
      %44 = sbr.rel (0) target = $region17
    $region16: #{tpu_custom_call.1} parent=1 // pred_region
      %46 = dma.done [#allocation3], 512
    $region17: #{tpu_custom_call.1} parent=1 // pred_fallthru
      _
    // Predicated region
    $region18: #{tpu_custom_call.1} parent=1 // pred_check
      _
    $region19: #{tpu_custom_call.1} parent=1 // pred_check_branch
      %48 = sbr.rel (0) target = $region21
    $region20: #{tpu_custom_call.1} parent=1 // pred_region
      %50 = dma.done [#allocation6], 512
    $region21: #{tpu_custom_call.1} parent=1 // pred_fallthru
      _
    %p52 = scmp.eq.s32.totalorder 0, 0
    // Predicated region
    $region22: #{tpu_custom_call.1} parent=1 // pred_check
      %p53 = pneg %p52
    $region23: #{tpu_custom_call.1} parent=1 // pred_check_branch
      %55 = sbr.rel (%p53) target = $region25
    $region24: #{tpu_custom_call.1} parent=1 // pred_region
      %56 = vst [vmem:[#allocation7] sm:$0xff] 0.0
      %57 = vst [vmem:[#allocation10] sm:$0xff] 0.0
    $region25: #{tpu_custom_call.1} parent=1 // pred_fallthru
      _
    %v58 = vld [vmem:[#allocation2] sm:$0xf]
    %v59 = vld [vmem:[#allocation2 + $0x4] sm:$0xf]
    %v60 = vld [vmem:[#allocation2 + $0x8] sm:$0xf]
    %v61 = vld [vmem:[#allocation2 + $0xc] sm:$0xf]
    %v62 = vld [vmem:[#allocation2 + $0x10] sm:$0xf]
    %v63 = vld [vmem:[#allocation2 + $0x14] sm:$0xf]
    %v64 = vld [vmem:[#allocation2 + $0x18] sm:$0xf]
    %v65 = vld [vmem:[#allocation2 + $0x1c] sm:$0xf]
    %v66 = vld [vmem:[#allocation5] sm:$0xf]
    %v67 = vld [vmem:[#allocation5 + $0x4] sm:$0xf]
    %v68 = vld [vmem:[#allocation5 + $0x8] sm:$0xf]
    %v69 = vld [vmem:[#allocation5 + $0xc] sm:$0xf]
    %v70 = vld [vmem:[#allocation5 + $0x10] sm:$0xf]
    %v71 = vld [vmem:[#allocation5 + $0x14] sm:$0xf]
    %v72 = vld [vmem:[#allocation5 + $0x18] sm:$0xf]
    %v73 = vld [vmem:[#allocation5 + $0x1c] sm:$0xf]
    %v74 = vld [vmem:[%s2] sm:$0x1]
    %v76 = vperm.slane %v74, 0
    %v86 = vunpack.c.l.b16 %v58
    %v87 = vunpack.c.l.b16 %v59
    %v88 = vunpack.c.l.b16 %v60
    %v89 = vunpack.c.l.b16 %v61
    %v90 = vunpack.c.l.b16 %v62
    %v91 = vunpack.c.l.b16 %v63
    %v92 = vunpack.c.l.b16 %v64
    %v93 = vunpack.c.l.b16 %v65
    %v94 = vpack.c.b16 %v87, %v86
    %v95 = vpack.c.b16 %v89, %v88
    %v96 = vpack.c.b16 %v91, %v90
    %v97 = vpack.c.b16 %v93, %v92
    %v106 = vunpack.c.l.b16 %v66
    %v107 = vunpack.c.l.b16 %v67
    %v108 = vunpack.c.l.b16 %v68
    %v109 = vunpack.c.l.b16 %v69
    %v110 = vunpack.c.l.b16 %v70
    %v111 = vunpack.c.l.b16 %v71
    %v112 = vunpack.c.l.b16 %v72
    %v113 = vunpack.c.l.b16 %v73
    %v114 = vpack.c.b16 %v107, %v106
    %v115 = vpack.c.b16 %v109, %v108
    %v116 = vpack.c.b16 %v111, %v110
    %v117 = vpack.c.b16 %v113, %v112
    %vm122 = vcmask 523264
    %v124 = vsel %vm122, %v94, 0
    %v127 = vsel %vm122, %v95, 0
    %v130 = vsel %vm122, %v96, 0
    %v133 = vsel %vm122, %v97, 0
    %135 = vmatpush.bf16.msra.mxu0 0
    %136 = vmatpush.bf16.msra.mxu0 0
    %137 = vmatpush.bf16.msra.mxu0 0
    %138 = vmatpush.bf16.msra.mxu0 0
    %139 = vmatpush.bf16.msra.mxu0 %v117
    %140 = vmatpush.bf16.msra.mxu0 %v116
    %141 = vmatpush.bf16.msra.mxu0 %v115
    %142 = vmatpush.bf16.msra.mxu0 %v114
    %143 = vmatmul.bf16.gmra.mxu0 %v124
    %v144 = vpop.f32.mrf.mxu0
    %v145 = vadd.f32 %v76, %v144
    %v146 = vpop.f32.mrf.mxu0
    %v147 = vadd.f32 %v76, %v146
    %148 = vmatmul.bf16.gmra.mxu0 %v127
    %v149 = vpop.f32.mrf.mxu0
    %v150 = vadd.f32 %v76, %v149
    %v151 = vpop.f32.mrf.mxu0
    %v152 = vadd.f32 %v76, %v151
    %153 = vmatmul.bf16.gmra.mxu0 %v130
    %v154 = vpop.f32.mrf.mxu0
    %v155 = vadd.f32 %v76, %v154
    %v156 = vpop.f32.mrf.mxu0
    %v157 = vadd.f32 %v76, %v156
    %158 = vmatmul.bf16.gmra.mxu0 %v133
    %v159 = vpop.f32.mrf.mxu0
    %v160 = vadd.f32 %v76, %v159
    %v161 = vpop.f32.mrf.mxu0
    %v162 = vadd.f32 %v76, %v161
    %163 = vdwg.mxu0
    %v164 = vld [vmem:[#allocation7] sm:$0xff]
    %v165 = vld [vmem:[#allocation10] sm:$0xff]
    %vm166 = vcmp.gt.f32.partialorder %v164, 0.5
    %v167 = vmul.f32 %v164, 0.2
    %v168 = vsel %vm166, 0.0, %v167
    %v169 = vadd.f32 %v168, %v145
    %vm170 = vcmp.gt.f32.partialorder %v169, 0.5
    %v171 = vsel %vm170, 1, 0
    %v172 = vcvt.s32.f32 %v171
    %v173 = vadd.f32 %v165, %v172
    %v174 = vmul.f32 %v169, 0.2
    %v175 = vsel %vm170, 0.0, %v174
    %v176 = vadd.f32 %v175, %v147
    %vm177 = vcmp.gt.f32.partialorder %v176, 0.5
    %v178 = vsel %vm177, 1, 0
    %v179 = vcvt.s32.f32 %v178
    %v180 = vadd.f32 %v173, %v179
    %v181 = vmul.f32 %v176, 0.2
    %v182 = vsel %vm177, 0.0, %v181
    %v183 = vadd.f32 %v182, %v150
    %vm184 = vcmp.gt.f32.partialorder %v183, 0.5
    %v185 = vsel %vm184, 1, 0
    %v186 = vcvt.s32.f32 %v185
    %v187 = vadd.f32 %v180, %v186
    %v188 = vmul.f32 %v183, 0.2
    %v189 = vsel %vm184, 0.0, %v188
    %v190 = vadd.f32 %v189, %v152
    %vm191 = vcmp.gt.f32.partialorder %v190, 0.5
    %v192 = vsel %vm191, 1, 0
    %v193 = vcvt.s32.f32 %v192
    %v194 = vadd.f32 %v187, %v193
    %v195 = vmul.f32 %v190, 0.2
    %v196 = vsel %vm191, 0.0, %v195
    %v197 = vadd.f32 %v196, %v155
    %vm198 = vcmp.gt.f32.partialorder %v197, 0.5
    %v199 = vsel %vm198, 1, 0
    %v200 = vcvt.s32.f32 %v199
    %v201 = vadd.f32 %v194, %v200
    %v202 = vmul.f32 %v197, 0.2
    %v203 = vsel %vm198, 0.0, %v202
    %v204 = vadd.f32 %v203, %v157
    %vm205 = vcmp.gt.f32.partialorder %v204, 0.5
    %v206 = vsel %vm205, 1, 0
    %v207 = vcvt.s32.f32 %v206
    %v208 = vadd.f32 %v201, %v207
    %v209 = vmul.f32 %v204, 0.2
    %v210 = vsel %vm205, 0.0, %v209
    %v211 = vadd.f32 %v210, %v160
    %vm212 = vcmp.gt.f32.partialorder %v211, 0.5
    %v213 = vsel %vm212, 1, 0
    %v214 = vcvt.s32.f32 %v213
    %v215 = vadd.f32 %v208, %v214
    %v216 = vmul.f32 %v211, 0.2
    %v217 = vsel %vm212, 0.0, %v216
    %v218 = vadd.f32 %v217, %v162
    %vm219 = vcmp.gt.f32.partialorder %v218, 0.5
    %v220 = vsel %vm219, 1, 0
    %v221 = vcvt.s32.f32 %v220
    %v222 = vadd.f32 %v215, %v221
    %223 = vst [vmem:[#allocation7] sm:$0xff] %v218
    %224 = vst [vmem:[#allocation10] sm:$0xff] %v222
    %225 = vst [vmem:[#allocation8] sm:$0xff] %v221
    // Predicated region
    $region26: #{tpu_custom_call.1} parent=1 // pred_check
      _
    $region27: #{tpu_custom_call.1} parent=1 // pred_check_branch
      %227 = sbr.rel (0) target = $region29
    $region28: #{tpu_custom_call.1} parent=1 // pred_region
      %229 = vsyncadd [#allocation4], 0
      %s231 = sshll.u32 [#allocation7], 4
      %s232 = int_to_ptr.vmem [resolvable:$true] %s231
      %s233 = sshll.u32 %s3, 4
      %s234 = int_to_ptr.hbm [resolvable:$true] %s233
      %236 = dma.vmem_to_hbm [thread:$0]  %s232, 128, %s234, [#allocation4]
    $region29: #{tpu_custom_call.1} parent=1 // pred_fallthru
      _
    // Predicated region
    $region30: #{tpu_custom_call.1} parent=1 // pred_check
      _
    $region31: #{tpu_custom_call.1} parent=1 // pred_check_branch
      %238 = sbr.rel (0) target = $region33
    $region32: #{tpu_custom_call.1} parent=1 // pred_region
      %240 = vsyncadd [#allocation9], 0
      %s242 = sshll.u32 [#allocation8], 4
      %s243 = int_to_ptr.vmem [resolvable:$true] %s242
      %s244 = sshll.u32 %s4, 4
      %s245 = int_to_ptr.hbm [resolvable:$true] %s244
      %247 = dma.vmem_to_hbm [thread:$0]  %s243, 128, %s245, [#allocation9]
    $region33: #{tpu_custom_call.1} parent=1 // pred_fallthru
      _
    // Predicated region
    $region34: #{tpu_custom_call.1} parent=1 // pred_check
      _
    $region35: #{tpu_custom_call.1} parent=1 // pred_check_branch
      %249 = sbr.rel (0) target = $region37
    $region36: #{tpu_custom_call.1} parent=1 // pred_region
      %251 = vsyncadd [#allocation9], 0
      %s253 = sshll.u32 [#allocation10], 4
      %s254 = int_to_ptr.vmem [resolvable:$true] %s253
      %s255 = sshll.u32 %s5, 4
      %s256 = int_to_ptr.hbm [resolvable:$true] %s255
      %258 = dma.vmem_to_hbm [thread:$0]  %s254, 128, %s256, [#allocation9]
    $region37: #{tpu_custom_call.1} parent=1 // pred_fallthru
      _
    // Predicated region
    $region38: #{tpu_custom_call.1} parent=1 // pred_check
      _
    $region39: #{tpu_custom_call.1} parent=1 // pred_check_branch
      %260 = sbr.rel (0) target = $region41
    $region40: #{tpu_custom_call.1} parent=1 // pred_region
      %262 = dma.done [#allocation4], 128
    $region41: #{tpu_custom_call.1} parent=1 // pred_fallthru
      _
    // Predicated region
    $region42: #{tpu_custom_call.1} parent=1 // pred_check
      _
    $region43: #{tpu_custom_call.1} parent=1 // pred_check_branch
      %264 = sbr.rel (0) target = $region45
    $region44: #{tpu_custom_call.1} parent=1 // pred_region
      %266 = dma.done [#allocation9], 128
    $region45: #{tpu_custom_call.1} parent=1 // pred_fallthru
      _
    // Predicated region
    $region46: #{tpu_custom_call.1} parent=1 // pred_check
      _
    $region47: #{tpu_custom_call.1} parent=1 // pred_check_branch
      %268 = sbr.rel (0) target = $region49
    $region48: #{tpu_custom_call.1} parent=1 // pred_region
      %270 = dma.done [#allocation9], 128
    $region49: #{tpu_custom_call.1} parent=1 // pred_fallthru
      _
    %271 = vsyncpa [#allocation3], 1
    %272 = vsyncpa [#allocation6], 1
    %273 = vsyncpa [#allocation4], 1
    %274 = vsyncpa [#allocation9], 1

</llo_original>
